<compile_context>
chip_gen: v5e
topology: v5e:2x2
jax: 0.10.0
libtpu: 0.0.40
codegen_flags: <defaults>
</compile_context>

<pallas_src>
import functools

import jax
import jax.numpy as jnp
from jax.experimental import pallas as pl
from jax.experimental.pallas import tpu as pltpu

VARIANCE = (0.1, 0.2)
_ROW_TILE = 2048          # priors per grid step (multiple of 128)


# --------------------------------------------------------------------------- #
# Pallas kernels
# --------------------------------------------------------------------------- #
def _iou_matrix_kernel(t_ref, p_ref, o_ref):
    """Pairwise Jaccard overlap for one image.
       t_ref: (O, 4) point-form ground-truth boxes (objects on sublanes)
       p_ref: (4, P) point-form priors (priors on lanes)
       o_ref: (O, P) IoU matrix."""
    t = t_ref[...]
    p = p_ref[...]
    tx1, ty1, tx2, ty2 = t[:, 0:1], t[:, 1:2], t[:, 2:3], t[:, 3:4]
    px1, py1, px2, py2 = p[0:1, :], p[1:2, :], p[2:3, :], p[3:4, :]
    iw = jnp.maximum(jnp.minimum(tx2, px2) - jnp.maximum(tx1, px1), 0.0)
    ih = jnp.maximum(jnp.minimum(ty2, py2) - jnp.maximum(ty1, py1), 0.0)
    inter = iw * ih
    area_t = (tx2 - tx1) * (ty2 - ty1)
    area_p = (px2 - px1) * (py2 - py1)
    o_ref[...] = inter / (area_t + area_p - inter + 1e-10)


def _fused_loss_kernel(conf_ref, locp_ref, loct_ref, side_ref,
                       ce_ref, psum_ref, *, smooth_point, v0, v1):
    """Single pass over a tile of T priors (priors on the lane axis).

    Produces:
      * per-prior cross-entropy  log_sum_exp(conf) - conf[label]  -> ce_ref (1, T)
        (used both for hard-negative mining and the final gated CE sum)
      * partial sums of the positive-only losses (EIoU box loss, iou-head
        smooth-L1, landmark smooth-L1) at row 0, lanes 0/1/2     -> psum_ref (8, 128)
    side_ref rows: [iou_pred, iou_target, label].
    """
    conf = conf_ref[...].astype(jnp.float32)          # (C, T)
    lab_f = side_ref[2:3, :]                          # (1, T)
    lab_i = lab_f.astype(jnp.int32)
    pos = lab_f > 0.5                                 # (1, T) positives

    # ---- per-prior cross-entropy (per-prior max; LSE is shift-invariant) ----
    cmax = jnp.max(conf, axis=0, keepdims=True)
    lse = jnp.log(jnp.sum(jnp.exp(conf - cmax), axis=0, keepdims=True)) + cmax
    cls_idx = jax.lax.broadcasted_iota(jnp.int32, conf.shape, 0)
    onehot = (cls_idx == lab_i).astype(jnp.float32)
    picked = jnp.sum(conf * onehot, axis=0, keepdims=True)
    ce_ref[...] = lse - picked                        # lane-dense (1, T) store

    lp = locp_ref[...]                                # (14, T)
    lt = loct_ref[...]                                # (14, T)

    # ---- EIoU-style box loss on decoded boxes (positives only) ----
    # TODO(synk): the reference's eiou_loss helper source is not provided;
    # reconstructed as a smooth penalty of (1 - IoU) between the
    # variance-decoded predicted and target boxes (IoU is invariant to the
    # prior's translation/scale, so the prior itself is not needed here).
    pcx, pcy = lp[0:1] * v0, lp[1:2] * v0
    pw = jnp.exp(jnp.clip(lp[2:3] * v1, -20.0, 20.0))
    ph = jnp.exp(jnp.clip(lp[3:4] * v1, -20.0, 20.0))
    tcx, tcy = lt[0:1] * v0, lt[1:2] * v0
    tw = jnp.exp(jnp.clip(lt[2:3] * v1, -20.0, 20.0))
    th = jnp.exp(jnp.clip(lt[3:4] * v1, -20.0, 20.0))
    px1, px2 = pcx - 0.5 * pw, pcx + 0.5 * pw
    py1, py2 = pcy - 0.5 * ph, pcy + 0.5 * ph
    tx1, tx2 = tcx - 0.5 * tw, tcx + 0.5 * tw
    ty1, ty2 = tcy - 0.5 * th, tcy + 0.5 * th
    iw = jnp.maximum(jnp.minimum(px2, tx2) - jnp.maximum(px1, tx1), 0.0)
    ih = jnp.maximum(jnp.minimum(py2, ty2) - jnp.maximum(py1, ty1), 0.0)
    inter = iw * ih
    union = pw * ph + tw * th - inter + 1e-10
    iou = inter * pl.reciprocal(union, approx=True)   # EUP divide, off VALU path
    d = 1.0 - iou
    eiou = jnp.where(d < smooth_point, 0.5 * d * d / smooth_point,
                     d - 0.5 * smooth_point)
    eiou_s = jnp.sum(jnp.where(pos, eiou, 0.0), keepdims=True)        # (1, 1)

    # ---- landmark smooth-L1 (rows 4:14), beta = 1, positives only ----
    dlm = jnp.abs(lp[4:14] - lt[4:14])                                # (10, T)
    sl1_lm = jnp.where(dlm < 1.0, 0.5 * dlm * dlm, dlm - 0.5)
    lm_per = jnp.sum(sl1_lm, axis=0, keepdims=True)                   # (1, T)
    lm_s = jnp.sum(jnp.where(pos, lm_per, 0.0), keepdims=True)

    # ---- iou-head smooth-L1, positives only ----
    di = jnp.abs(side_ref[0:1, :] - side_ref[1:2, :])
    sl1_i = jnp.where(di < 1.0, 0.5 * di * di, di - 0.5)
    iouh_s = jnp.sum(jnp.where(pos, sl1_i, 0.0), keepdims=True)

    # ---- partial sums -> row 0, lanes 0/1/2 of this step's (8,128) block ----
    row = jax.lax.broadcasted_iota(jnp.int32, (8, 128), 0)
    lane = jax.lax.broadcasted_iota(jnp.int32, (8, 128), 1)
    vec = jnp.zeros((8, 128), jnp.float32)
    vec = jnp.where((row == 0) & (lane == 0), eiou_s, vec)
    vec = jnp.where((row == 0) & (lane == 1), iouh_s, vec)
    vec = jnp.where((row == 0) & (lane == 2), lm_s, vec)
    psum_ref[...] = vec


# --------------------------------------------------------------------------- #
# Pallas wrappers
# --------------------------------------------------------------------------- #
def jaccard_pallas(truths4, priors_pt):
    """Batched pairwise IoU: truths4 (B, O, 4), priors_pt (P, 4) -> (B, O, P)."""
    B, O, _ = truths4.shape
    P = priors_pt.shape[0]
    return pl.pallas_call(
        _iou_matrix_kernel,
        out_shape=jax.ShapeDtypeStruct((B, O, P), jnp.float32),
        grid=(B,),
        in_specs=[
            pl.BlockSpec((None, O, 4), lambda b: (b, 0, 0)),
            pl.BlockSpec((4, P), lambda b: (0, 0)),
        ],
        out_specs=pl.BlockSpec((None, O, P), lambda b: (b, 0, 0)),
        compiler_params=pltpu.CompilerParams(dimension_semantics=("parallel",)),
    )(truths4.astype(jnp.float32), priors_pt.T.astype(jnp.float32))


def _row_tiling(np_rows):
    up128 = ((np_rows + 127) // 128) * 128
    tile = min(_ROW_TILE, up128)
    np_pad = ((np_rows + tile - 1) // tile) * tile
    return tile, np_pad


def fused_losses_pallas(conf_T, locp_T, loct_T, side, T, *, smooth_point, v0, v1):
    C, NPp = conf_T.shape
    G = NPp // T
    kernel = functools.partial(_fused_loss_kernel, smooth_point=smooth_point,
                               v0=v0, v1=v1)
    col = lambda i: (0, i)
    return pl.pallas_call(
        kernel,
        out_shape=(jax.ShapeDtypeStruct((1, NPp), jnp.float32),
                   jax.ShapeDtypeStruct((8 * G, 128), jnp.float32)),
        grid=(G,),
        in_specs=[
            pl.BlockSpec((C, T), col),
            pl.BlockSpec((14, T), col),
            pl.BlockSpec((14, T), col),
            pl.BlockSpec((3, T), col),
        ],
        out_specs=(pl.BlockSpec((1, T), col),
                   pl.BlockSpec((8, 128), lambda i: (i, 0))),
        compiler_params=pltpu.CompilerParams(dimension_semantics=("parallel",)),
    )(conf_T, locp_T, loct_T, side)


# --------------------------------------------------------------------------- #
# JAX glue: matching / encoding / mining bookkeeping
# --------------------------------------------------------------------------- #
def _point_form(priors):
    return jnp.concatenate([priors[:, 0:2] - priors[:, 2:4] / 2.0,
                            priors[:, 0:2] + priors[:, 2:4] / 2.0], axis=1)


def _encode(matched, priors, variances):
    """matched: (B, P, 14) point-form GT + landmarks, priors: (P, 4) center-form."""
    p_cxcy, p_wh = priors[:, 0:2], priors[:, 2:4]
    g_cxcy = ((matched[..., 0:2] + matched[..., 2:4]) / 2.0 - p_cxcy) \
             / (variances[0] * p_wh)
    g_wh = jnp.log((matched[..., 2:4] - matched[..., 0:2]) / p_wh) / variances[1]
    lms = [(matched[..., 4 + 2 * i:6 + 2 * i] - p_cxcy) / (variances[0] * p_wh)
           for i in range(5)]
    return jnp.concatenate([g_cxcy, g_wh] + lms, axis=-1)


def _match_batched(truths, labels, priors, threshold, variances):
    """truths: (B, O, 14), labels: (B, O), priors: (P, 4) center-form."""
    B, O = labels.shape
    overlaps = jaccard_pallas(truths[..., 0:4], _point_form(priors))    # (B, O, P)
    best_prior_idx = jnp.argmax(overlaps, axis=2)                       # (B, O)
    best_truth_overlap = jnp.max(overlaps, axis=1)                      # (B, P)
    best_truth_idx = jnp.argmax(overlaps, axis=1)                       # (B, P)
    b = jnp.arange(B)
    best_truth_overlap = best_truth_overlap.at[b[:, None], best_prior_idx].set(2.0)
    for j in range(O):            # small static loop, mirrors the PyTorch match()
        best_truth_idx = best_truth_idx.at[b, best_prior_idx[:, j]].set(j)
    matches = jnp.take_along_axis(truths, best_truth_idx[:, :, None], axis=1)
    conf = jnp.take_along_axis(labels, best_truth_idx, axis=1).astype(jnp.int32)
    conf = jnp.where(best_truth_overlap < threshold, 0, conf)
    loc = _encode(matches, priors, variances)
    return loc, conf, best_truth_overlap


def _to_lane_major(x2d, np_pad):
    """(NP, F) -> (F, np_pad) f32, zero-padded along the lane (prior) axis."""
    xt = jnp.transpose(x2d.astype(jnp.float32))
    pad = np_pad - xt.shape[1]
    if pad:
        xt = jnp.pad(xt, ((0, 0), (0, pad)))
    return xt


def multibox_loss_forward(loc_data, conf_data, iou_data, priors, targets, *,
                          num_classes, overlap_thresh, negpos_ratio, smooth_point,
                          variance=VARIANCE):
    num, num_priors = loc_data.shape[0], priors.shape[0]
    NP = num * num_priors

    # ---- matching / encoding (batched Pallas IoU + JAX glue) ----
    loc_t, conf_t, iou_t = _match_batched(
        targets[..., 0:14].astype(jnp.float32), targets[..., 14],
        priors.astype(jnp.float32), overlap_thresh, variance)
    pos = conf_t > 0                                                    # (num, P)

    # ---- lane-major, tile-padded kernel inputs ----
    T, NP_pad = _row_tiling(NP)
    conf_T = _to_lane_major(conf_data.reshape(NP, num_classes), NP_pad)  # (C, NPp)
    locp_T = _to_lane_major(loc_data.reshape(NP, 14), NP_pad)            # (14, NPp)
    loct_T = _to_lane_major(loc_t.reshape(NP, 14), NP_pad)               # (14, NPp)
    side = jnp.stack([iou_data.reshape(NP).astype(jnp.float32),
                      iou_t.reshape(NP).astype(jnp.float32),
                      conf_t.reshape(NP).astype(jnp.float32)], axis=0)   # (3, NP)
    if NP_pad > NP:
        side = jnp.pad(side, ((0, 0), (0, NP_pad - NP)))   # padded label=0 -> ignored

    # ---- single fused pass: per-prior CE + positive-only loss partial sums ----
    full_ce, psum1 = fused_losses_pallas(conf_T, locp_T, loct_T, side, T,
                                         smooth_point=smooth_point,
                                         v0=variance[0], v1=variance[1])
    eiou_sum = jnp.sum(psum1[:, 0])
    iouh_sum = jnp.sum(psum1[:, 1])
    lm_sum = jnp.sum(psum1[:, 2])

    # ---- hard-negative mining (sort-based) ----
    # TODO(synk): torch.sort-based double-argsort mining has no clean Pallas/TPU
    # vector equivalent; done with XLA argsort.
    ce_all = full_ce[0, :NP]                                   # per-prior CE
    pos_flat = pos.reshape(NP)
    loss_c = jnp.where(pos_flat, 0.0, ce_all).reshape(num, num_priors)
    loss_idx = jnp.argsort(-loss_c, axis=1)
    idx_rank = jnp.argsort(loss_idx, axis=1)
    num_pos = jnp.sum(pos.astype(jnp.int32), axis=1, keepdims=True)
    num_neg = jnp.minimum(negpos_ratio * num_pos, num_priors - 1)
    neg = idx_rank < num_neg
    posneg = (pos | neg).reshape(NP)

    # ---- pos|neg gated cross-entropy (tiny masked reduce; conf not re-read) ----
    ce_sum = jnp.sum(jnp.where(posneg, ce_all, 0.0))

    N = jnp.maximum(jnp.sum(num_pos).astype(jnp.float32), 1.0)
    loss_bbox_eiou = eiou_sum / N
    loss_iouhead_smoothl1 = iouh_sum / N
    loss_lm_smoothl1 = lm_sum / (N * 5.0)
    loss_cls_ce = ce_sum / N
    return loss_bbox_eiou, loss_iouhead_smoothl1, loss_lm_smoothl1, loss_cls_ce


# --------------------------------------------------------------------------- #
if __name__ == "__main__":
    key = jax.random.PRNGKey(0)
    B, P, C, O = 2, 128, 2, 4          # batch, num_priors, num_classes, num_objs

    # priors: 16x8 grid of center-form default boxes
    ix = jnp.arange(P) % 16
    iy = jnp.arange(P) // 16
    priors = jnp.stack([(ix + 0.5) / 16.0, (iy + 0.5) / 8.0,
                        jnp.full((P,), 0.15), jnp.full((P,), 0.15)],
                       axis=1).astype(jnp.float32)

    ks = jax.random.split(key, 6)
    centers = jax.random.uniform(ks[0], (B, O, 2), minval=0.25, maxval=0.75)
    sizes = jax.random.uniform(ks[1], (B, O, 2), minval=0.1, maxval=0.3)
    x1y1 = centers - sizes / 2.0
    x2y2 = centers + sizes / 2.0
    lms = (centers[:, :, None, :] +
           (jax.random.uniform(ks[2], (B, O, 5, 2)) - 0.5) *
           sizes[:, :, None, :]).reshape(B, O, 10)
    labels = jnp.ones((B, O, 1), jnp.float32)
    targets = jnp.concatenate([x1y1, x2y2, lms, labels], axis=-1).astype(jnp.float32)

    loc_data = (0.1 * jax.random.normal(ks[3], (B, P, 14))).astype(jnp.float32)
    conf_data = jax.random.normal(ks[4], (B, P, C)).astype(jnp.float32)
    iou_data = jax.random.uniform(ks[5], (B, P, 1)).astype(jnp.float32)

    loss_fn = jax.jit(functools.partial(
        multibox_loss_forward, num_classes=C, overlap_thresh=0.35,
        negpos_ratio=3, smooth_point=0.2))
    losses = loss_fn(loc_data, conf_data, iou_data, priors, targets)
    jax.block_until_ready(losses)
    print("KERNEL_OK")
</pallas_src>

<mosaic_0001>
module attributes {stable_mosaic.version = 11 : i64} {
  func.func @_iou_matrix_kernel(%arg0: i32, %arg1: memref<1x4x4xf32, #tpu.memory_space<vmem>>, %arg2: memref<4x128xf32, #tpu.memory_space<vmem>>, %arg3: memref<1x4x128xf32, #tpu.memory_space<vmem>>) attributes {dimension_semantics = [#tpu.dimension_semantics<parallel>], iteration_bounds = array<i64: 2>, scalar_prefetch = 0 : i64, scratch_operands = 0 : i64, tpu.core_type = #tpu.core_type<tc>, window_params = [{transform_indices = @transform_0, window_bounds = array<i64: 1, 4, 4>}, {pipeline_mode = #tpu.pipeline_mode<synchronous>, transform_indices = @transform_1, window_bounds = array<i64: 4, 128>}, {transform_indices = @transform_2, window_bounds = array<i64: 1, 4, 128>}]} {
    %c0 = arith.constant 0 : index
    %c0_0 = arith.constant 0 : index
    %c0_1 = arith.constant 0 : index
    %0 = vector.load %arg1[%c0, %c0_0, %c0_1] : memref<1x4x4xf32, #tpu.memory_space<vmem>>, vector<1x4x4xf32>
    %1 = vector.shape_cast %0 : vector<1x4x4xf32> to vector<4x4xf32>
    %c0_2 = arith.constant 0 : index
    %c0_3 = arith.constant 0 : index
    %2 = vector.load %arg2[%c0_2, %c0_3] : memref<4x128xf32, #tpu.memory_space<vmem>>, vector<4x128xf32>
    %3 = vector.extract_strided_slice %1 {offsets = [0, 0], sizes = [4, 1], strides = [1, 1]} : vector<4x4xf32> to vector<4x1xf32>
    %4 = vector.extract_strided_slice %1 {offsets = [0, 1], sizes = [4, 1], strides = [1, 1]} : vector<4x4xf32> to vector<4x1xf32>
    %5 = vector.extract_strided_slice %1 {offsets = [0, 2], sizes = [4, 1], strides = [1, 1]} : vector<4x4xf32> to vector<4x1xf32>
    %6 = vector.extract_strided_slice %1 {offsets = [0, 3], sizes = [4, 1], strides = [1, 1]} : vector<4x4xf32> to vector<4x1xf32>
    %7 = vector.extract_strided_slice %2 {offsets = [0, 0], sizes = [1, 128], strides = [1, 1]} : vector<4x128xf32> to vector<1x128xf32>
    %8 = vector.extract_strided_slice %2 {offsets = [1, 0], sizes = [1, 128], strides = [1, 1]} : vector<4x128xf32> to vector<1x128xf32>
    %9 = vector.extract_strided_slice %2 {offsets = [2, 0], sizes = [1, 128], strides = [1, 1]} : vector<4x128xf32> to vector<1x128xf32>
    %10 = vector.extract_strided_slice %2 {offsets = [3, 0], sizes = [1, 128], strides = [1, 1]} : vector<4x128xf32> to vector<1x128xf32>
    %11 = vector.broadcast %5 : vector<4x1xf32> to vector<4x128xf32>
    %12 = vector.broadcast %9 : vector<1x128xf32> to vector<4x128xf32>
    %13 = arith.minimumf %11, %12 : vector<4x128xf32>
    %14 = vector.broadcast %3 : vector<4x1xf32> to vector<4x128xf32>
    %15 = vector.broadcast %7 : vector<1x128xf32> to vector<4x128xf32>
    %16 = arith.maximumf %14, %15 : vector<4x128xf32>
    %17 = arith.subf %13, %16 : vector<4x128xf32>
    %cst = arith.constant 0.000000e+00 : f32
    %18 = vector.broadcast %cst : f32 to vector<4x128xf32>
    %19 = arith.maximumf %17, %18 : vector<4x128xf32>
    %20 = vector.broadcast %6 : vector<4x1xf32> to vector<4x128xf32>
    %21 = vector.broadcast %10 : vector<1x128xf32> to vector<4x128xf32>
    %22 = arith.minimumf %20, %21 : vector<4x128xf32>
    %23 = vector.broadcast %4 : vector<4x1xf32> to vector<4x128xf32>
    %24 = vector.broadcast %8 : vector<1x128xf32> to vector<4x128xf32>
    %25 = arith.maximumf %23, %24 : vector<4x128xf32>
    %26 = arith.subf %22, %25 : vector<4x128xf32>
    %cst_4 = arith.constant 0.000000e+00 : f32
    %27 = vector.broadcast %cst_4 : f32 to vector<4x128xf32>
    %28 = arith.maximumf %26, %27 : vector<4x128xf32>
    %29 = arith.mulf %19, %28 : vector<4x128xf32>
    %30 = arith.subf %5, %3 : vector<4x1xf32>
    %31 = arith.subf %6, %4 : vector<4x1xf32>
    %32 = arith.mulf %30, %31 : vector<4x1xf32>
    %33 = arith.subf %9, %7 : vector<1x128xf32>
    %34 = arith.subf %10, %8 : vector<1x128xf32>
    %35 = arith.mulf %33, %34 : vector<1x128xf32>
    %36 = vector.broadcast %32 : vector<4x1xf32> to vector<4x128xf32>
    %37 = vector.broadcast %35 : vector<1x128xf32> to vector<4x128xf32>
    %38 = arith.addf %36, %37 : vector<4x128xf32>
    %39 = arith.subf %38, %29 : vector<4x128xf32>
    %cst_5 = arith.constant 1.000000e-10 : f32
    %40 = vector.broadcast %cst_5 : f32 to vector<4x128xf32>
    %41 = arith.addf %39, %40 : vector<4x128xf32>
    %42 = arith.divf %29, %41 : vector<4x128xf32>
    %c0_6 = arith.constant 0 : index
    %c0_7 = arith.constant 0 : index
    %c0_8 = arith.constant 0 : index
    %43 = vector.load %arg3[%c0_6, %c0_7, %c0_8] : memref<1x4x128xf32, #tpu.memory_space<vmem>>, vector<1x4x128xf32>
    %44 = vector.shape_cast %43 : vector<1x4x128xf32> to vector<4x128xf32>
    %45 = vector.shape_cast %42 : vector<4x128xf32> to vector<1x4x128xf32>
    tpu.vector_store %arg3[%c0_6, %c0_7, %c0_8], %45 {strides = array<i32>} : memref<1x4x128xf32, #tpu.memory_space<vmem>>, vector<1x4x128xf32>,
    return
  }
  func.func @transform_0(%arg0: i32) -> (i32, i32, i32) {
    %c0_i32 = arith.constant 0 : i32
    %c0_i32_0 = arith.constant 0 : i32
    %c0_i32_1 = arith.constant 0 : i32
    return %arg0, %c0_i32, %c0_i32_0 : i32, i32, i32
  }
  func.func @transform_1(%arg0: i32) -> (i32, i32) {
    %c0_i32 = arith.constant 0 : i32
    %c0_i32_0 = arith.constant 0 : i32
    %c0_i32_1 = arith.constant 0 : i32
    return %c0_i32, %c0_i32_0 : i32, i32
  }
  func.func @transform_2(%arg0: i32) -> (i32, i32, i32) {
    %c0_i32 = arith.constant 0 : i32
    %c0_i32_0 = arith.constant 0 : i32
    %c0_i32_1 = arith.constant 0 : i32
    return %arg0, %c0_i32, %c0_i32_0 : i32, i32, i32
  }
}

module attributes {stable_mosaic.version = 11 : i64} {
  func.func @_fused_loss_kernel(%arg0: i32, %arg1: memref<2x256xf32, #tpu.memory_space<vmem>>, %arg2: memref<14x256xf32, #tpu.memory_space<vmem>>, %arg3: memref<14x256xf32, #tpu.memory_space<vmem>>, %arg4: memref<3x256xf32, #tpu.memory_space<vmem>>, %arg5: memref<1x256xf32, #tpu.memory_space<vmem>>, %arg6: memref<8x128xf32, #tpu.memory_space<vmem>>) attributes {dimension_semantics = [#tpu.dimension_semantics<parallel>], iteration_bounds = array<i64: 1>, scalar_prefetch = 0 : i64, scratch_operands = 0 : i64, tpu.core_type = #tpu.core_type<tc>, window_params = [{transform_indices = @transform_0, window_bounds = array<i64: 2, 256>}, {transform_indices = @transform_1, window_bounds = array<i64: 14, 256>}, {transform_indices = @transform_2, window_bounds = array<i64: 14, 256>}, {transform_indices = @transform_3, window_bounds = array<i64: 3, 256>}, {transform_indices = @transform_4, window_bounds = array<i64: 1, 256>}, {transform_indices = @transform_5, window_bounds = array<i64: 8, 128>}]} {
    %c0 = arith.constant 0 : index
    %c0_0 = arith.constant 0 : index
    %0 = vector.load %arg1[%c0, %c0_0] : memref<2x256xf32, #tpu.memory_space<vmem>>, vector<2x256xf32>
    %c2 = arith.constant 2 : index
    %c0_1 = arith.constant 0 : index
    %1 = vector.load %arg4[%c2, %c0_1] : memref<3x256xf32, #tpu.memory_space<vmem>>, vector<1x256xf32>
    %2 = arith.fptosi %1 : vector<1x256xf32> to vector<1x256xi32>
    %cst = arith.constant 5.000000e-01 : f32
    %3 = vector.broadcast %cst : f32 to vector<1x256xf32>
    %4 = arith.cmpf ogt, %1, %3 : vector<1x256xf32>
    %cst_2 = arith.constant dense<0xFF800000> : vector<256xf32>
    %5 = vector.multi_reduction <maximumf>, %0, %cst_2 [0] : vector<2x256xf32> to vector<256xf32>
    %6 = vector.shape_cast %5 : vector<256xf32> to vector<1x256xf32>
    %7 = vector.broadcast %6 : vector<1x256xf32> to vector<2x256xf32>
    %8 = arith.subf %0, %7 : vector<2x256xf32>
    %9 = math.exp %8 : vector<2x256xf32>
    %cst_3 = arith.constant dense<0.000000e+00> : vector<256xf32>
    %10 = vector.multi_reduction <add>, %9, %cst_3 [0] : vector<2x256xf32> to vector<256xf32>
    %11 = vector.shape_cast %10 : vector<256xf32> to vector<1x256xf32>
    %12 = math.log %11 : vector<1x256xf32>
    %13 = arith.addf %12, %6 : vector<1x256xf32>
    %14 = tpu.iota {dimensions = array<i32: 0>} : vector<2x256xi32>
    %15 = vector.broadcast %2 : vector<1x256xi32> to vector<2x256xi32>
    %16 = arith.cmpi eq, %14, %15 : vector<2x256xi32>
    %17 = arith.extui %16 : vector<2x256xi1> to vector<2x256xi32>
    %18 = arith.sitofp %17 : vector<2x256xi32> to vector<2x256xf32>
    %19 = arith.mulf %0, %18 : vector<2x256xf32>
    %cst_4 = arith.constant dense<0.000000e+00> : vector<256xf32>
    %20 = vector.multi_reduction <add>, %19, %cst_4 [0] : vector<2x256xf32> to vector<256xf32>
    %21 = vector.shape_cast %20 : vector<256xf32> to vector<1x256xf32>
    %22 = arith.subf %13, %21 : vector<1x256xf32>
    %c0_5 = arith.constant 0 : index
    %c0_6 = arith.constant 0 : index
    %23 = vector.load %arg5[%c0_5, %c0_6] : memref<1x256xf32, #tpu.memory_space<vmem>>, vector<1x256xf32>
    tpu.vector_store %arg5[%c0_5, %c0_6], %22 {strides = array<i32>} : memref<1x256xf32, #tpu.memory_space<vmem>>, vector<1x256xf32>,
    %c0_7 = arith.constant 0 : index
    %c0_8 = arith.constant 0 : index
    %24 = vector.load %arg2[%c0_7, %c0_8] : memref<14x256xf32, #tpu.memory_space<vmem>>, vector<14x256xf32>
    %c0_9 = arith.constant 0 : index
    %c0_10 = arith.constant 0 : index
    %25 = vector.load %arg3[%c0_9, %c0_10] : memref<14x256xf32, #tpu.memory_space<vmem>>, vector<14x256xf32>
    %26 = vector.extract_strided_slice %24 {offsets = [0, 0], sizes = [1, 256], strides = [1, 1]} : vector<14x256xf32> to vector<1x256xf32>
    %cst_11 = arith.constant 1.000000e-01 : f32
    %27 = vector.broadcast %cst_11 : f32 to vector<1x256xf32>
    %28 = arith.mulf %26, %27 : vector<1x256xf32>
    %29 = vector.extract_strided_slice %24 {offsets = [1, 0], sizes = [1, 256], strides = [1, 1]} : vector<14x256xf32> to vector<1x256xf32>
    %cst_12 = arith.constant 1.000000e-01 : f32
    %30 = vector.broadcast %cst_12 : f32 to vector<1x256xf32>
    %31 = arith.mulf %29, %30 : vector<1x256xf32>
    %32 = vector.extract_strided_slice %24 {offsets = [2, 0], sizes = [1, 256], strides = [1, 1]} : vector<14x256xf32> to vector<1x256xf32>
    %cst_13 = arith.constant 2.000000e-01 : f32
    %33 = vector.broadcast %cst_13 : f32 to vector<1x256xf32>
    %34 = arith.mulf %32, %33 : vector<1x256xf32>
    %cst_14 = arith.constant -2.000000e+01 : f32
    %cst_15 = arith.constant 2.000000e+01 : f32
    %35 = vector.broadcast %cst_14 : f32 to vector<1x256xf32>
    %36 = arith.maximumf %35, %34 : vector<1x256xf32>
    %37 = vector.broadcast %cst_15 : f32 to vector<1x256xf32>
    %38 = arith.minimumf %37, %36 : vector<1x256xf32>
    %39 = math.exp %38 : vector<1x256xf32>
    %40 = vector.extract_strided_slice %24 {offsets = [3, 0], sizes = [1, 256], strides = [1, 1]} : vector<14x256xf32> to vector<1x256xf32>
    %cst_16 = arith.constant 2.000000e-01 : f32
    %41 = vector.broadcast %cst_16 : f32 to vector<1x256xf32>
    %42 = arith.mulf %40, %41 : vector<1x256xf32>
    %cst_17 = arith.constant -2.000000e+01 : f32
    %cst_18 = arith.constant 2.000000e+01 : f32
    %43 = vector.broadcast %cst_17 : f32 to vector<1x256xf32>
    %44 = arith.maximumf %43, %42 : vector<1x256xf32>
    %45 = vector.broadcast %cst_18 : f32 to vector<1x256xf32>
    %46 = arith.minimumf %45, %44 : vector<1x256xf32>
    %47 = math.exp %46 : vector<1x256xf32>
    %48 = vector.extract_strided_slice %25 {offsets = [0, 0], sizes = [1, 256], strides = [1, 1]} : vector<14x256xf32> to vector<1x256xf32>
    %cst_19 = arith.constant 1.000000e-01 : f32
    %49 = vector.broadcast %cst_19 : f32 to vector<1x256xf32>
    %50 = arith.mulf %48, %49 : vector<1x256xf32>
    %51 = vector.extract_strided_slice %25 {offsets = [1, 0], sizes = [1, 256], strides = [1, 1]} : vector<14x256xf32> to vector<1x256xf32>
    %cst_20 = arith.constant 1.000000e-01 : f32
    %52 = vector.broadcast %cst_20 : f32 to vector<1x256xf32>
    %53 = arith.mulf %51, %52 : vector<1x256xf32>
    %54 = vector.extract_strided_slice %25 {offsets = [2, 0], sizes = [1, 256], strides = [1, 1]} : vector<14x256xf32> to vector<1x256xf32>
    %cst_21 = arith.constant 2.000000e-01 : f32
    %55 = vector.broadcast %cst_21 : f32 to vector<1x256xf32>
    %56 = arith.mulf %54, %55 : vector<1x256xf32>
    %cst_22 = arith.constant -2.000000e+01 : f32
    %cst_23 = arith.constant 2.000000e+01 : f32
    %57 = vector.broadcast %cst_22 : f32 to vector<1x256xf32>
    %58 = arith.maximumf %57, %56 : vector<1x256xf32>
    %59 = vector.broadcast %cst_23 : f32 to vector<1x256xf32>
    %60 = arith.minimumf %59, %58 : vector<1x256xf32>
    %61 = math.exp %60 : vector<1x256xf32>
    %62 = vector.extract_strided_slice %25 {offsets = [3, 0], sizes = [1, 256], strides = [1, 1]} : vector<14x256xf32> to vector<1x256xf32>
    %cst_24 = arith.constant 2.000000e-01 : f32
    %63 = vector.broadcast %cst_24 : f32 to vector<1x256xf32>
    %64 = arith.mulf %62, %63 : vector<1x256xf32>
    %cst_25 = arith.constant -2.000000e+01 : f32
    %cst_26 = arith.constant 2.000000e+01 : f32
    %65 = vector.broadcast %cst_25 : f32 to vector<1x256xf32>
    %66 = arith.maximumf %65, %64 : vector<1x256xf32>
    %67 = vector.broadcast %cst_26 : f32 to vector<1x256xf32>
    %68 = arith.minimumf %67, %66 : vector<1x256xf32>
    %69 = math.exp %68 : vector<1x256xf32>
    %cst_27 = arith.constant 5.000000e-01 : f32
    %70 = vector.broadcast %cst_27 : f32 to vector<1x256xf32>
    %71 = arith.mulf %70, %39 : vector<1x256xf32>
    %72 = arith.subf %28, %71 : vector<1x256xf32>
    %cst_28 = arith.constant 5.000000e-01 : f32
    %73 = vector.broadcast %cst_28 : f32 to vector<1x256xf32>
    %74 = arith.mulf %73, %39 : vector<1x256xf32>
    %75 = arith.addf %28, %74 : vector<1x256xf32>
    %cst_29 = arith.constant 5.000000e-01 : f32
    %76 = vector.broadcast %cst_29 : f32 to vector<1x256xf32>
    %77 = arith.mulf %76, %47 : vector<1x256xf32>
    %78 = arith.subf %31, %77 : vector<1x256xf32>
    %cst_30 = arith.constant 5.000000e-01 : f32
    %79 = vector.broadcast %cst_30 : f32 to vector<1x256xf32>
    %80 = arith.mulf %79, %47 : vector<1x256xf32>
    %81 = arith.addf %31, %80 : vector<1x256xf32>
    %cst_31 = arith.constant 5.000000e-01 : f32
    %82 = vector.broadcast %cst_31 : f32 to vector<1x256xf32>
    %83 = arith.mulf %82, %61 : vector<1x256xf32>
    %84 = arith.subf %50, %83 : vector<1x256xf32>
    %cst_32 = arith.constant 5.000000e-01 : f32
    %85 = vector.broadcast %cst_32 : f32 to vector<1x256xf32>
    %86 = arith.mulf %85, %61 : vector<1x256xf32>
    %87 = arith.addf %50, %86 : vector<1x256xf32>
    %cst_33 = arith.constant 5.000000e-01 : f32
    %88 = vector.broadcast %cst_33 : f32 to vector<1x256xf32>
    %89 = arith.mulf %88, %69 : vector<1x256xf32>
    %90 = arith.subf %53, %89 : vector<1x256xf32>
    %cst_34 = arith.constant 5.000000e-01 : f32
    %91 = vector.broadcast %cst_34 : f32 to vector<1x256xf32>
    %92 = arith.mulf %91, %69 : vector<1x256xf32>
    %93 = arith.addf %53, %92 : vector<1x256xf32>
    %94 = arith.minimumf %75, %87 : vector<1x256xf32>
    %95 = arith.maximumf %72, %84 : vector<1x256xf32>
    %96 = arith.subf %94, %95 : vector<1x256xf32>
    %cst_35 = arith.constant 0.000000e+00 : f32
    %97 = vector.broadcast %cst_35 : f32 to vector<1x256xf32>
    %98 = arith.maximumf %96, %97 : vector<1x256xf32>
    %99 = arith.minimumf %81, %93 : vector<1x256xf32>
    %100 = arith.maximumf %78, %90 : vector<1x256xf32>
    %101 = arith.subf %99, %100 : vector<1x256xf32>
    %cst_36 = arith.constant 0.000000e+00 : f32
    %102 = vector.broadcast %cst_36 : f32 to vector<1x256xf32>
    %103 = arith.maximumf %101, %102 : vector<1x256xf32>
    %104 = arith.mulf %98, %103 : vector<1x256xf32>
    %105 = arith.mulf %39, %47 : vector<1x256xf32>
    %106 = arith.mulf %61, %69 : vector<1x256xf32>
    %107 = arith.addf %105, %106 : vector<1x256xf32>
    %108 = arith.subf %107, %104 : vector<1x256xf32>
    %cst_37 = arith.constant 1.000000e-10 : f32
    %109 = vector.broadcast %cst_37 : f32 to vector<1x256xf32>
    %110 = arith.addf %108, %109 : vector<1x256xf32>
    %111 = tpu.reciprocal %110 {approx = true} : vector<1x256xf32> -> vector<1x256xf32>
    %112 = arith.mulf %104, %111 : vector<1x256xf32>
    %cst_38 = arith.constant 1.000000e+00 : f32
    %113 = vector.broadcast %cst_38 : f32 to vector<1x256xf32>
    %114 = arith.subf %113, %112 : vector<1x256xf32>
    %cst_39 = arith.constant 2.000000e-01 : f32
    %115 = vector.broadcast %cst_39 : f32 to vector<1x256xf32>
    %116 = arith.cmpf olt, %114, %115 : vector<1x256xf32>
    %cst_40 = arith.constant 5.000000e-01 : f32
    %117 = vector.broadcast %cst_40 : f32 to vector<1x256xf32>
    %118 = arith.mulf %117, %114 : vector<1x256xf32>
    %119 = arith.mulf %118, %114 : vector<1x256xf32>
    %cst_41 = arith.constant 2.000000e-01 : f32
    %120 = vector.broadcast %cst_41 : f32 to vector<1x256xf32>
    %121 = arith.divf %119, %120 : vector<1x256xf32>
    %cst_42 = arith.constant 1.000000e-01 : f32
    %122 = vector.broadcast %cst_42 : f32 to vector<1x256xf32>
    %123 = arith.subf %114, %122 : vector<1x256xf32>
    %124 = arith.select %116, %121, %123 : vector<1x256xi1>, vector<1x256xf32>
    %cst_43 = arith.constant 0.000000e+00 : f32
    %125 = vector.broadcast %cst_43 : f32 to vector<1x256xf32>
    %126 = arith.select %4, %124, %125 : vector<1x256xi1>, vector<1x256xf32>
    %127 = vector.shape_cast %126 : vector<1x256xf32> to vector<1x1x256xf32>
    %cst_44 = arith.constant dense<0.000000e+00> : vector<1xf32>
    %128 = vector.multi_reduction <add>, %127, %cst_44 [1, 2] : vector<1x1x256xf32> to vector<1xf32>
    %129 = vector.shape_cast %128 : vector<1xf32> to vector<1x1x1xf32>
    %130 = vector.extract %129[0, 0, 0] : f32 from vector<1x1x1xf32>
    %131 = vector.broadcast %130 : f32 to vector<1x1xf32>
    %132 = vector.extract_strided_slice %24 {offsets = [4, 0], sizes = [10, 256], strides = [1, 1]} : vector<14x256xf32> to vector<10x256xf32>
    %133 = vector.extract_strided_slice %25 {offsets = [4, 0], sizes = [10, 256], strides = [1, 1]} : vector<14x256xf32> to vector<10x256xf32>
    %134 = arith.subf %132, %133 : vector<10x256xf32>
    %135 = math.absf %134 : vector<10x256xf32>
    %cst_45 = arith.constant 1.000000e+00 : f32
    %136 = vector.broadcast %cst_45 : f32 to vector<10x256xf32>
    %137 = arith.cmpf olt, %135, %136 : vector<10x256xf32>
    %cst_46 = arith.constant 5.000000e-01 : f32
    %138 = vector.broadcast %cst_46 : f32 to vector<10x256xf32>
    %139 = arith.mulf %138, %135 : vector<10x256xf32>
    %140 = arith.mulf %139, %135 : vector<10x256xf32>
    %cst_47 = arith.constant 5.000000e-01 : f32
    %141 = vector.broadcast %cst_47 : f32 to vector<10x256xf32>
    %142 = arith.subf %135, %141 : vector<10x256xf32>
    %143 = arith.select %137, %140, %142 : vector<10x256xi1>, vector<10x256xf32>
    %cst_48 = arith.constant dense<0.000000e+00> : vector<256xf32>
    %144 = vector.multi_reduction <add>, %143, %cst_48 [0] : vector<10x256xf32> to vector<256xf32>
    %145 = vector.shape_cast %144 : vector<256xf32> to vector<1x256xf32>
    %cst_49 = arith.constant 0.000000e+00 : f32
    %146 = vector.broadcast %cst_49 : f32 to vector<1x256xf32>
    %147 = arith.select %4, %145, %146 : vector<1x256xi1>, vector<1x256xf32>
    %148 = vector.shape_cast %147 : vector<1x256xf32> to vector<1x1x256xf32>
    %cst_50 = arith.constant dense<0.000000e+00> : vector<1xf32>
    %149 = vector.multi_reduction <add>, %148, %cst_50 [1, 2] : vector<1x1x256xf32> to vector<1xf32>
    %150 = vector.shape_cast %149 : vector<1xf32> to vector<1x1x1xf32>
    %151 = vector.extract %150[0, 0, 0] : f32 from vector<1x1x1xf32>
    %152 = vector.broadcast %151 : f32 to vector<1x1xf32>
    %c0_51 = arith.constant 0 : index
    %c0_52 = arith.constant 0 : index
    %153 = vector.load %arg4[%c0_51, %c0_52] : memref<3x256xf32, #tpu.memory_space<vmem>>, vector<1x256xf32>
    %c1 = arith.constant 1 : index
    %c0_53 = arith.constant 0 : index
    %154 = vector.load %arg4[%c1, %c0_53] : memref<3x256xf32, #tpu.memory_space<vmem>>, vector<1x256xf32>
    %155 = arith.subf %153, %154 : vector<1x256xf32>
    %156 = math.absf %155 : vector<1x256xf32>
    %cst_54 = arith.constant 1.000000e+00 : f32
    %157 = vector.broadcast %cst_54 : f32 to vector<1x256xf32>
    %158 = arith.cmpf olt, %156, %157 : vector<1x256xf32>
    %cst_55 = arith.constant 5.000000e-01 : f32
    %159 = vector.broadcast %cst_55 : f32 to vector<1x256xf32>
    %160 = arith.mulf %159, %156 : vector<1x256xf32>
    %161 = arith.mulf %160, %156 : vector<1x256xf32>
    %cst_56 = arith.constant 5.000000e-01 : f32
    %162 = vector.broadcast %cst_56 : f32 to vector<1x256xf32>
    %163 = arith.subf %156, %162 : vector<1x256xf32>
    %164 = arith.select %158, %161, %163 : vector<1x256xi1>, vector<1x256xf32>
    %cst_57 = arith.constant 0.000000e+00 : f32
    %165 = vector.broadcast %cst_57 : f32 to vector<1x256xf32>
    %166 = arith.select %4, %164, %165 : vector<1x256xi1>, vector<1x256xf32>
    %167 = vector.shape_cast %166 : vector<1x256xf32> to vector<1x1x256xf32>
    %cst_58 = arith.constant dense<0.000000e+00> : vector<1xf32>
    %168 = vector.multi_reduction <add>, %167, %cst_58 [1, 2] : vector<1x1x256xf32> to vector<1xf32>
    %169 = vector.shape_cast %168 : vector<1xf32> to vector<1x1x1xf32>
    %170 = vector.extract %169[0, 0, 0] : f32 from vector<1x1x1xf32>
    %171 = vector.broadcast %170 : f32 to vector<1x1xf32>
    %172 = tpu.iota {dimensions = array<i32: 0>} : vector<8x128xi32>
    %173 = tpu.iota {dimensions = array<i32: 1>} : vector<8x128xi32>
    %cst_59 = arith.constant 0.000000e+00 : f32
    %174 = vector.broadcast %cst_59 : f32 to vector<8x128xf32>
    %c0_i32 = arith.constant 0 : i32
    %175 = vector.broadcast %c0_i32 : i32 to vector<8x128xi32>
    %176 = arith.cmpi eq, %172, %175 : vector<8x128xi32>
    %c0_i32_60 = arith.constant 0 : i32
    %177 = vector.broadcast %c0_i32_60 : i32 to vector<8x128xi32>
    %178 = arith.cmpi eq, %173, %177 : vector<8x128xi32>
    %179 = arith.andi %176, %178 : vector<8x128xi1>
    %180 = vector.shape_cast %131 : vector<1x1xf32> to vector<1x1xf32>
    %181 = vector.broadcast %180 : vector<1x1xf32> to vector<8x128xf32>
    %182 = arith.select %179, %181, %174 : vector<8x128xi1>, vector<8x128xf32>
    %c0_i32_61 = arith.constant 0 : i32
    %183 = vector.broadcast %c0_i32_61 : i32 to vector<8x128xi32>
    %184 = arith.cmpi eq, %172, %183 : vector<8x128xi32>
    %c1_i32 = arith.constant 1 : i32
    %185 = vector.broadcast %c1_i32 : i32 to vector<8x128xi32>
    %186 = arith.cmpi eq, %173, %185 : vector<8x128xi32>
    %187 = arith.andi %184, %186 : vector<8x128xi1>
    %188 = vector.shape_cast %171 : vector<1x1xf32> to vector<1x1xf32>
    %189 = vector.broadcast %188 : vector<1x1xf32> to vector<8x128xf32>
    %190 = arith.select %187, %189, %182 : vector<8x128xi1>, vector<8x128xf32>
    %c0_i32_62 = arith.constant 0 : i32
    %191 = vector.broadcast %c0_i32_62 : i32 to vector<8x128xi32>
    %192 = arith.cmpi eq, %172, %191 : vector<8x128xi32>
    %c2_i32 = arith.constant 2 : i32
    %193 = vector.broadcast %c2_i32 : i32 to vector<8x128xi32>
    %194 = arith.cmpi eq, %173, %193 : vector<8x128xi32>
    %195 = arith.andi %192, %194 : vector<8x128xi1>
    %196 = vector.shape_cast %152 : vector<1x1xf32> to vector<1x1xf32>
    %197 = vector.broadcast %196 : vector<1x1xf32> to vector<8x128xf32>
    %198 = arith.select %195, %197, %190 : vector<8x128xi1>, vector<8x128xf32>
    %c0_63 = arith.constant 0 : index
    %c0_64 = arith.constant 0 : index
    %199 = vector.load %arg6[%c0_63, %c0_64] : memref<8x128xf32, #tpu.memory_space<vmem>>, vector<8x128xf32>
    tpu.vector_store %arg6[%c0_63, %c0_64], %198 {strides = array<i32>} : memref<8x128xf32, #tpu.memory_space<vmem>>, vector<8x128xf32>,
    return
  }
  func.func @transform_0(%arg0: i32) -> (i32, i32) {
    %c0_i32 = arith.constant 0 : i32
    %c0_i32_0 = arith.constant 0 : i32
    return %c0_i32, %arg0 : i32, i32
  }
  func.func @transform_1(%arg0: i32) -> (i32, i32) {
    %c0_i32 = arith.constant 0 : i32
    %c0_i32_0 = arith.constant 0 : i32
    return %c0_i32, %arg0 : i32, i32
  }
  func.func @transform_2(%arg0: i32) -> (i32, i32) {
    %c0_i32 = arith.constant 0 : i32
    %c0_i32_0 = arith.constant 0 : i32
    return %c0_i32, %arg0 : i32, i32
  }
  func.func @transform_3(%arg0: i32) -> (i32, i32) {
    %c0_i32 = arith.constant 0 : i32
    %c0_i32_0 = arith.constant 0 : i32
    return %c0_i32, %arg0 : i32, i32
  }
  func.func @transform_4(%arg0: i32) -> (i32, i32) {
    %c0_i32 = arith.constant 0 : i32
    %c0_i32_0 = arith.constant 0 : i32
    return %c0_i32, %arg0 : i32, i32
  }
  func.func @transform_5(%arg0: i32) -> (i32, i32) {
    %c0_i32 = arith.constant 0 : i32
    %c0_i32_0 = arith.constant 0 : i32
    return %arg0, %c0_i32 : i32, i32
  }
}

</mosaic_0001>

<llo_original>
// kernel: multibox_loss_forward.2
$region0: #{multibox_loss_forward.2}
  #allocation0 [shape = 'u32[]', space=smem, size = 0x4, offset = 0x4, fixed_abs, tag = 'smem constant byte address 0x4 - core index']
  #allocation1 [shape = 'u32[72,128]{1,0:T(1,128)}', space=vmem, size = 0x9000, scoped, tag = 'internal scratch']
  %s0 = inlined_call_operand.vmem [shape: f32[2,4,4], index: 0, kind: input, shape index: {}]
  %s1 = inlined_call_operand.vmem [shape: f32[4,128], index: 1, kind: input, shape index: {}]
  %s2 = inlined_call_operand.vmem [shape: f32[2,4,128], index: 2, kind: output, shape index: {}]
  %s3 = sld [smem:[#allocation0]]
  $region41: #{multibox_loss_forward.2} parent=0
    _
  %s5 = ssub.s32 1, %s3
  %s6 = scalar_select 0, %s5, %s3
  loop: start=0, step=1, limit=4
  $region2: #{multibox_loss_forward.2} parent=0 // loop_pre_header
    _
  $region3: #{multibox_loss_forward.2} parent=0 // loop_header
    %s8 = sphi 0, %s12
    %p9 = scmp.ge.s32.totalorder %s8, 4
    %s18 = sphi 0, %s20
    %s21 = sphi 0, %s18
    %s22 = sphi 0, %s21
    %s38 = sphi 0, %s22
    %s42 = sphi 0, %s42
    %s44 = sphi 0, %s42
    %s45 = sphi 0, %s44
    %s59 = sphi 0, %s45
    %s65 = sphi 0, %s67
    %s68 = sphi 0, %s65
    %s69 = sphi 0, %s68
    %s85 = sphi 0, %s69
  $region4: #{multibox_loss_forward.2} parent=0 // loop_header_branch
    %11 = sbr.rel (%p9) target = $region8
  $region5: #{multibox_loss_forward.2} parent=0 // loop_body
    %s13 = ssub.s32 %s8, 1
    %s14 = ssub.s32 %s8, 2
    %s15 = sadd.s32 %s8, 1
    %s16 = ssub.s32 %s8, %s15
    %p17 = scmp.eq.s32.totalorder %s16, 0
    %s19 = sadd.s32 %s18, 1
    %s20 = scalar_select %p17, %s18, %s19
    %p23 = pneg %p17
    %p24 = scmp.eq.s32.totalorder %s8, 1
    %p25 = por %p23, %p24
    %p26 = scmp.ne.s32.totalorder %s18, %s21
    %p27 = scmp.eq.s32.totalorder %s8, 0
    %p28 = por %p26, %p27
    %p29 = scmp.ne.s32.totalorder %s18, %s21
    %p30 = scmp.eq.s32.totalorder %s13, 1
    %p31 = por %p29, %p30
    %p32 = scmp.ne.s32.totalorder %s21, %s22
    %p33 = scmp.eq.s32.totalorder %s13, 0
    %p34 = por %p32, %p33
    %p35 = scmp.ne.s32.totalorder %s21, %s22
    %p36 = scmp.eq.s32.totalorder %s14, 1
    %p37 = por %p35, %p36
    %p39 = scmp.ne.s32.totalorder %s22, %s38
    %p40 = scmp.eq.s32.totalorder %s14, 0
    %p41 = por %p39, %p40
    %s43 = sadd.s32 %s42, 1
    %p46 = scmp.eq.s32.totalorder %s8, 1
    %p47 = scmp.ne.s32.totalorder %s42, %s44
    %p48 = scmp.eq.s32.totalorder %s8, 0
    %p49 = por %p47, %p48
    %p50 = scmp.ne.s32.totalorder %s42, %s44
    %p51 = scmp.eq.s32.totalorder %s13, 1
    %p52 = por %p50, %p51
    %p53 = scmp.ne.s32.totalorder %s44, %s45
    %p54 = scmp.eq.s32.totalorder %s13, 0
    %p55 = por %p53, %p54
    %p56 = scmp.ne.s32.totalorder %s44, %s45
    %p57 = scmp.eq.s32.totalorder %s14, 1
    %p58 = por %p56, %p57
    %p60 = scmp.ne.s32.totalorder %s45, %s59
    %p61 = scmp.eq.s32.totalorder %s14, 0
    %p62 = por %p60, %p61
    %s63 = ssub.s32 %s8, %s15
    %p64 = scmp.eq.s32.totalorder %s63, 0
    %s66 = sadd.s32 %s65, 1
    %s67 = scalar_select %p64, %s65, %s66
    %p70 = pneg %p64
    %p71 = scmp.eq.s32.totalorder %s8, 1
    %p72 = por %p70, %p71
    %p73 = scmp.ne.s32.totalorder %s65, %s68
    %p74 = scmp.eq.s32.totalorder %s8, 0
    %p75 = por %p73, %p74
    %p76 = scmp.ne.s32.totalorder %s65, %s68
    %p77 = scmp.eq.s32.totalorder %s13, 1
    %p78 = por %p76, %p77
    %p79 = scmp.ne.s32.totalorder %s68, %s69
    %p80 = scmp.eq.s32.totalorder %s13, 0
    %p81 = por %p79, %p80
    %p82 = scmp.ne.s32.totalorder %s68, %s69
    %p83 = scmp.eq.s32.totalorder %s14, 1
    %p84 = por %p82, %p83
    %p86 = scmp.ne.s32.totalorder %s69, %s85
    %p87 = scmp.eq.s32.totalorder %s14, 0
    %p88 = por %p86, %p87
    %p89 = scmp.le.s32.totalorder 1, %s8
    %p90 = scmp.lt.s32.totalorder %s8, 3
    %p91 = pnand %p89, %p90
    %p92 = pneg %p91
    // Predicated region
    $region9: #{multibox_loss_forward.2} parent=5 // pred_check
      _
    $region10: #{multibox_loss_forward.2} parent=5 // pred_check_branch
      %94 = sbr.rel (%p91) target = $region12
    $region11: #{multibox_loss_forward.2} parent=5 // pred_region
      %s95 = ssub.s32 %s8, 1
      // Predicated region
      $region13: #{multibox_loss_forward.2} parent=11 // pred_check
        %p96 = pneg %p55
      $region14: #{multibox_loss_forward.2} parent=11 // pred_check_branch
        %98 = sbr.rel (%p96) target = $region16
      $region15: #{multibox_loss_forward.2} parent=11 // pred_region
        _
      $region16: #{multibox_loss_forward.2} parent=11 // pred_fallthru
        _
    $region12: #{multibox_loss_forward.2} parent=5 // pred_fallthru
      _
    %p99 = scmp.lt.s32.totalorder %s8, 2
    // Predicated region
    $region17: #{multibox_loss_forward.2} parent=5 // pred_check
      %p100 = pneg %p99
    $region18: #{multibox_loss_forward.2} parent=5 // pred_check_branch
      %102 = sbr.rel (%p100) target = $region20
    $region19: #{multibox_loss_forward.2} parent=5 // pred_region
      // Predicated region
      $region21: #{multibox_loss_forward.2} parent=19 // pred_check
        %p103 = pneg %p28
      $region22: #{multibox_loss_forward.2} parent=19 // pred_check_branch
        %105 = sbr.rel (%p103) target = $region24
      $region23: #{multibox_loss_forward.2} parent=19 // pred_region
        %p106 = scmp.lt.s32.totalorder %s8, 1
        %s107 = scalar_select %p106, %s8, 1
        %s108 = smul.addr %s107, 4
        %s109 = scalar_lea.vmem %s0, %s108
      $region24: #{multibox_loss_forward.2} parent=19 // pred_fallthru
        _
    $region20: #{multibox_loss_forward.2} parent=5 // pred_fallthru
      _
    %p110 = scmp.le.s32.totalorder 1, %s8
    %p111 = scmp.lt.s32.totalorder %s8, 3
    %p112 = pnand %p110, %p111
    %p113 = pneg %p112
    // Predicated region
    $region25: #{multibox_loss_forward.2} parent=5 // pred_check
      _
    $region26: #{multibox_loss_forward.2} parent=5 // pred_check_branch
      %115 = sbr.rel (%p112) target = $region28
    $region27: #{multibox_loss_forward.2} parent=5 // pred_region
      %s116 = ssub.s32 %s8, 1
      %p117 = scmp.lt.s32.totalorder %s13, 1
      %s118 = scalar_select %p117, %s13, 1
      %s119 = smul.addr %s118, 4
      %s120 = scalar_lea.vmem %s0, %s119
      %p121 = pneg %p34
      %p122 = pneg %p31
      %p123 = pneg %p55
      %p124 = pneg %p52
      %p125 = pneg %p81
      %p126 = pneg %p78
      %p127 = scmp.lt.s32.totalorder %s13, 1
      %s128 = scalar_select %p127, %s13, 1
      %s129 = smul.addr %s128, 4
      %s130 = scalar_lea.vmem %s2, %s129
      %p131 = scmp.lt.s32.totalorder %s13, 1
      %s132 = scalar_select %p131, %s13, 1
      %s133 = smul.addr %s132, 4
      %s134 = scalar_lea.vmem %s0, %s133
      %p135 = scmp.lt.s32.totalorder %s13, 1
      %s136 = scalar_select %p135, %s13, 1
      %s137 = smul.addr %s136, 4
      %s138 = scalar_lea.vmem %s2, %s137
      %v139 = vld [vmem:[%s134] sm:$0xf]
      %v140 = vld [vmem:[%s1] sm:$0xf]
      %142 = vset.pattern.permute.xlu0 2
      %143 = vperm.xlu0 %142, %v139
      %v144 = vpop.permute.xlu0 %143
      %v146 = vperm.slane %v140, 2
      %v147 = vmin.f32 %v144, %v146
      %148 = vset.pattern.permute.xlu0 0
      %149 = vperm.xlu0 %148, %v139
      %v150 = vpop.permute.xlu0 %149
      %v152 = vperm.slane %v140, 0
      %v153 = vmax.f32 %v150, %v152
      %v154 = vsub.f32 %v147, %v153
      %v155 = vmax.f32 %v154, 0.0
      %156 = vset.pattern.permute.xlu0 3
      %157 = vperm.xlu0 %156, %v139
      %v158 = vpop.permute.xlu0 %157
      %v160 = vperm.slane %v140, 3
      %v161 = vmin.f32 %v158, %v160
      %162 = vset.pattern.permute.xlu0 1
      %163 = vperm.xlu0 %162, %v139
      %v164 = vpop.permute.xlu0 %163
      %v166 = vperm.slane %v140, 1
      %v167 = vmax.f32 %v164, %v166
      %v168 = vsub.f32 %v161, %v167
      %v169 = vmax.f32 %v168, 0.0
      %v170 = vmul.f32 %v155, %v169
      %171 = vrot.lane.b32.xlu0 %v139, 2
      %v172 = vpop.permute.xlu0 %171
      %v174 = vsub.f32 %v139, %v172
      %176 = vrot.lane.b32.xlu0 %v174, 127
      %v177 = vpop.permute.xlu0 %176
      %v179 = vmul.f32 %v174, %v177
      %v181 = vrot.slane %v140, 6
      %v183 = vsub.f32 %v140, %v181
      %v185 = vrot.slane %v183, 1
      %v187 = vmul.f32 %v183, %v185
      %189 = vset.pattern.permute.xlu0 2
      %190 = vperm.xlu0 %189, %v179
      %v191 = vpop.permute.xlu0 %190
      %v193 = vperm.slane %v187, 2
      %v194 = vadd.f32 %v191, %v193
      %v195 = vsub.f32 %v194, %v170
      %v196 = vadd.f32 %v195, 1e-10
      %v197 = vrcp.pop %v196
      %v198 = vmul.f32 %v196, %v197
      %v199 = vsub.f32 1.0, %v198
      %v200 = vmul.f32 %v197, %v199
      %v201 = vadd.f32 %v197, %v200
      %vm202 = vweird.f32 %v196
      %vm203 = vweird.f32 %v197
      %vm204 = vmor %vm202, %vm203
      %v205 = vsel %vm204, %v197, %v201
      %v206 = vand.u32 2147483647, %v196
      %vm207 = vcmp.eq.f32.partialorder %v206, 8.507059e+37
      %v208 = vand.u32 %v196, 2147483648
      %v209 = vor.u32 1.1754944e-38, %v208
      %v210 = vsel %vm207, %v209, %v205
      %v211 = vmul.f32 %v170, %v210
      %212 = vst [vmem:[%s138] sm:$0xf] %v211
      %p213 = scmp.lt.s32.totalorder %s13, 1
      %s214 = scalar_select %p213, %s13, 1
      %s215 = smul.addr %s214, 4
      %s216 = scalar_lea.vmem %s2, %s215
      // Predicated region
      $region29: #{multibox_loss_forward.2} parent=27 // pred_check
        %p217 = pneg %p78
      $region30: #{multibox_loss_forward.2} parent=27 // pred_check_branch
        %219 = sbr.rel (%p217) target = $region32
      $region31: #{multibox_loss_forward.2} parent=27 // pred_region
        _
      $region32: #{multibox_loss_forward.2} parent=27 // pred_fallthru
        _
    $region28: #{multibox_loss_forward.2} parent=5 // pred_fallthru
      _
    %p220 = scmp.le.s32.totalorder 2, %s8
    // Predicated region
    $region33: #{multibox_loss_forward.2} parent=5 // pred_check
      %p221 = pneg %p220
    $region34: #{multibox_loss_forward.2} parent=5 // pred_check_branch
      %223 = sbr.rel (%p221) target = $region36
    $region35: #{multibox_loss_forward.2} parent=5 // pred_region
      %s224 = ssub.s32 %s8, 2
      // Predicated region
      $region37: #{multibox_loss_forward.2} parent=35 // pred_check
        %p225 = pneg %p84
      $region38: #{multibox_loss_forward.2} parent=35 // pred_check_branch
        %227 = sbr.rel (%p225) target = $region40
      $region39: #{multibox_loss_forward.2} parent=35 // pred_region
        %p228 = scmp.lt.s32.totalorder %s14, 1
        %s229 = scalar_select %p228, %s14, 1
        %s230 = smul.addr %s229, 4
        %s231 = scalar_lea.vmem %s2, %s230
      $region40: #{multibox_loss_forward.2} parent=35 // pred_fallthru
        _
    $region36: #{multibox_loss_forward.2} parent=5 // pred_fallthru
      _
  $region6: #{multibox_loss_forward.2} parent=0 // loop_footer
    %s12 = sadd.s32 1, %s8
  $region7: #{multibox_loss_forward.2} parent=0 // loop_footer_branch
    %7 = sbr.rel target = $region3
  $region8: #{multibox_loss_forward.2} parent=0 // loop_exit
    _

// kernel: multibox_loss_forward.3
$region0: #{multibox_loss_forward.3}
  #allocation0 [shape = 'u32[]', space=smem, size = 0x4, offset = 0x4, fixed_abs, tag = 'smem constant byte address 0x4 - core index']
  #allocation1 [shape = 'u32[72,128]{1,0:T(1,128)}', space=vmem, size = 0x9000, scoped, tag = 'internal scratch']
  %s0 = inlined_call_operand.vmem [shape: f32[2,256], index: 0, kind: input, shape index: {}]
  %s1 = inlined_call_operand.vmem [shape: f32[14,256], index: 1, kind: input, shape index: {}]
  %s2 = inlined_call_operand.vmem [shape: f32[14,256], index: 2, kind: input, shape index: {}]
  %s3 = inlined_call_operand.vmem [shape: f32[3,256], index: 3, kind: input, shape index: {}]
  %s4 = inlined_call_operand.vmem [shape: f32[1,256], index: 4, kind: output, shape index: {0}]
  %s5 = inlined_call_operand.vmem [shape: f32[8,128], index: 5, kind: output, shape index: {1}]
  %6 = xla_tuple %s4, %s5
  %s7 = sld [smem:[#allocation0]]
  $region34: #{multibox_loss_forward.3} parent=0
    _
  %s9 = ssub.s32 1, %s7
  %s10 = scalar_select 0, %s9, %s7
  // Predicated region
  $region2: #{multibox_loss_forward.3} parent=0 // pred_check
    _
  $region3: #{multibox_loss_forward.3} parent=0 // pred_check_branch
    %12 = sbr.rel (0) target = $region5
  $region4: #{multibox_loss_forward.3} parent=0 // pred_region
    _
  $region5: #{multibox_loss_forward.3} parent=0 // pred_fallthru
    _
  // Predicated region
  $region6: #{multibox_loss_forward.3} parent=0 // pred_check
    _
  $region7: #{multibox_loss_forward.3} parent=0 // pred_check_branch
    %14 = sbr.rel (0) target = $region9
  $region8: #{multibox_loss_forward.3} parent=0 // pred_region
    _
  $region9: #{multibox_loss_forward.3} parent=0 // pred_fallthru
    _
  // Predicated region
  $region10: #{multibox_loss_forward.3} parent=0 // pred_check
    _
  $region11: #{multibox_loss_forward.3} parent=0 // pred_check_branch
    %16 = sbr.rel (0) target = $region13
  $region12: #{multibox_loss_forward.3} parent=0 // pred_region
    _
  $region13: #{multibox_loss_forward.3} parent=0 // pred_fallthru
    _
  // Predicated region
  $region14: #{multibox_loss_forward.3} parent=0 // pred_check
    _
  $region15: #{multibox_loss_forward.3} parent=0 // pred_check_branch
    %18 = sbr.rel (0) target = $region17
  $region16: #{multibox_loss_forward.3} parent=0 // pred_region
    _
  $region17: #{multibox_loss_forward.3} parent=0 // pred_fallthru
    _
  %v19 = vld [vmem:[%s0] sm:$0xf]
  %s20 = scalar_lea.vmem %s3, 2
  %v21 = vld [vmem:[%s20] ss:$4 sm:$0x3]
  %v22 = vcvt.f32.s32.to.zero.pseudo %v21
  %vm23 = vcmp.gt.f32.partialorder %v21, 0.5
  %25 = vst [vmem:[#allocation1] ss:$4 sm:$0xff] %v19
  %v26 = vld.sshfl [vmem:[#allocation1] sm:$0xff pattern:$0x73625140]
  %v27 = vld.sshfl [vmem:[#allocation1 + $0x8] sm:$0xff pattern:$0x73625140]
  %vm30 = vcmask 1041408
  %v31 = vsel %vm30, %v26, -inf
  %v32 = vrot.slane %v31, 4
  %v33 = vmax.f32 %v31, %v32
  %v34 = vrot.slane %v33, 2
  %v35 = vmax.f32 %v33, %v34
  %v36 = vrot.slane %v35, 1
  %v37 = vmax.f32 %v35, %v36
  %v38 = vsel %vm30, %v27, -inf
  %v39 = vrot.slane %v38, 4
  %v40 = vmax.f32 %v38, %v39
  %v41 = vrot.slane %v40, 2
  %v42 = vmax.f32 %v40, %v41
  %v43 = vrot.slane %v42, 1
  %v44 = vmax.f32 %v42, %v43
  %v47 = vrot.slane %v44, 6
  %v48 = vsel %vm30, %v37, %v47
  %v50 = vsub.f32 %v19, %v48
  %v51 = vmul.f32 %v50, 1.442695
  %v52 = vpow.pop %v51
  %54 = vst [vmem:[#allocation1] ss:$4 sm:$0xff] %v52
  %v55 = vld.sshfl [vmem:[#allocation1] sm:$0xff pattern:$0x73625140]
  %v56 = vld.sshfl [vmem:[#allocation1 + $0x8] sm:$0xff pattern:$0x73625140]
  %v59 = vsel %vm30, %v55, 0.0
  %v60 = vrot.slane %v59, 4
  %v61 = vadd.f32 %v59, %v60
  %v62 = vrot.slane %v61, 2
  %v63 = vadd.f32 %v61, %v62
  %v64 = vrot.slane %v63, 1
  %v65 = vadd.f32 %v63, %v64
  %v66 = vsel %vm30, %v56, 0.0
  %v67 = vrot.slane %v66, 4
  %v68 = vadd.f32 %v66, %v67
  %v69 = vrot.slane %v68, 2
  %v70 = vadd.f32 %v68, %v69
  %v71 = vrot.slane %v70, 1
  %v72 = vadd.f32 %v70, %v71
  %v73 = vlog2.pop %v65
  %v74 = vmul.f32 %v73, 0.6931472
  %v75 = vlog2.pop %v72
  %v76 = vmul.f32 %v75, 0.6931472
  %v77 = vadd.f32 %v74, %v37
  %v78 = vadd.f32 %v76, %v44
  %v79 = vlaneseq
  %v80 = vshrl.u32 %v79, 7
  %v81 = vperm.slane %v22, 0
  %v82 = vperm.slane %v22, 1
  %vm83 = vcmp.eq.s32.totalorder %v80, %v81
  %vm84 = vcmp.eq.s32.totalorder %v80, %v82
  %v85 = vsel %vm83, 1, 0
  %v86 = vsel %vm84, 1, 0
  %v87 = vcvt.s32.f32 %v85
  %v88 = vcvt.s32.f32 %v86
  %v91 = vrot.slane %v88, 6
  %v92 = vsel %vm30, %v87, %v91
  %v94 = vmul.f32 %v19, %v92
  %96 = vst [vmem:[#allocation1] ss:$4 sm:$0xff] %v94
  %v97 = vld.sshfl [vmem:[#allocation1] sm:$0xff pattern:$0x73625140]
  %v98 = vld.sshfl [vmem:[#allocation1 + $0x8] sm:$0xff pattern:$0x73625140]
  %v101 = vsel %vm30, %v97, 0.0
  %v102 = vrot.slane %v101, 4
  %v103 = vadd.f32 %v101, %v102
  %v104 = vrot.slane %v103, 2
  %v105 = vadd.f32 %v103, %v104
  %v106 = vrot.slane %v105, 1
  %v107 = vadd.f32 %v105, %v106
  %v108 = vsel %vm30, %v98, 0.0
  %v109 = vrot.slane %v108, 4
  %v110 = vadd.f32 %v108, %v109
  %v111 = vrot.slane %v110, 2
  %v112 = vadd.f32 %v110, %v111
  %v113 = vrot.slane %v112, 1
  %v114 = vadd.f32 %v112, %v113
  %v115 = vsub.f32 %v77, %v107
  %v116 = vsub.f32 %v78, %v114
  %v119 = vrot.slane %v116, 7
  %vm120 = vcmask 1040384
  %v121 = vsel %vm120, %v115, %v119
  %v123 = vlaneseq
  %vm124 = vcmp.ge.s32.totalorder %v123, 0
  %vm125 = vcmp.lt.s32.totalorder %v123, 256
  %vm126 = vmand %vm124, %vm125
  %127 = vst.msk [vmem:[%s4] sm:$0x3] %vm126, %v121
  %v128 = vld [vmem:[%s1] sm:$0xff]
  %v129 = vld [vmem:[%s1 + $0x8] sm:$0xff]
  %v130 = vld [vmem:[%s1 + $0x10] sm:$0x3f]
  %v131 = vld [vmem:[%s1 + $0x18] sm:$0x3f]
  %v132 = vld [vmem:[%s2] sm:$0xff]
  %v133 = vld [vmem:[%s2 + $0x8] sm:$0xff]
  %v134 = vld [vmem:[%s2 + $0x10] sm:$0x3f]
  %v135 = vld [vmem:[%s2 + $0x18] sm:$0x3f]
  %v136 = vmul.f32 %v128, 0.1
  %v137 = vmul.f32 %v129, 0.1
  %v138 = vmul.f32 %v128, 0.2
  %v139 = vmul.f32 %v129, 0.2
  %v140 = vmax.f32 %v138, -20.0
  %v141 = vmax.f32 %v139, -20.0
  %v142 = vmin.f32 %v140, 20.0
  %v143 = vmin.f32 %v141, 20.0
  %v144 = vmul.f32 %v142, 1.442695
  %v145 = vpow.pop %v144
  %v146 = vmul.f32 %v143, 1.442695
  %v147 = vpow.pop %v146
  %v148 = vmul.f32 %v132, 0.1
  %v149 = vmul.f32 %v133, 0.1
  %v150 = vmul.f32 %v132, 0.2
  %v151 = vmul.f32 %v133, 0.2
  %v152 = vmax.f32 %v150, -20.0
  %v153 = vmax.f32 %v151, -20.0
  %v154 = vmin.f32 %v152, 20.0
  %v155 = vmin.f32 %v153, 20.0
  %v156 = vmul.f32 %v154, 1.442695
  %v157 = vpow.pop %v156
  %v158 = vmul.f32 %v155, 1.442695
  %v159 = vpow.pop %v158
  %v160 = vmul.f32 %v145, 0.5
  %v161 = vmul.f32 %v147, 0.5
  %v164 = vrot.slane %v160, 2
  %v165 = vrot.slane %v161, 2
  %v168 = vsub.f32 %v136, %v164
  %v169 = vsub.f32 %v137, %v165
  %v170 = vadd.f32 %v136, %v164
  %v171 = vadd.f32 %v137, %v165
  %v172 = vmul.f32 %v157, 0.5
  %v173 = vmul.f32 %v159, 0.5
  %v176 = vrot.slane %v172, 2
  %v177 = vrot.slane %v173, 2
  %v180 = vsub.f32 %v148, %v176
  %v181 = vsub.f32 %v149, %v177
  %v182 = vadd.f32 %v148, %v176
  %v183 = vadd.f32 %v149, %v177
  %v184 = vmin.f32 %v170, %v182
  %v185 = vmin.f32 %v171, %v183
  %v186 = vmax.f32 %v168, %v180
  %v187 = vmax.f32 %v169, %v181
  %v188 = vsub.f32 %v184, %v186
  %v189 = vsub.f32 %v185, %v187
  %v190 = vmax.f32 %v188, 0.0
  %v191 = vmax.f32 %v189, 0.0
  %v194 = vrot.slane %v190, 1
  %v195 = vrot.slane %v191, 1
  %v198 = vmul.f32 %v190, %v194
  %v199 = vmul.f32 %v191, %v195
  %v202 = vrot.slane %v145, 1
  %v203 = vrot.slane %v147, 1
  %v206 = vmul.f32 %v145, %v202
  %v207 = vmul.f32 %v147, %v203
  %v210 = vrot.slane %v157, 1
  %v211 = vrot.slane %v159, 1
  %v214 = vmul.f32 %v157, %v210
  %v215 = vmul.f32 %v159, %v211
  %v216 = vadd.f32 %v206, %v214
  %v217 = vadd.f32 %v207, %v215
  %v220 = vrot.slane %v198, 6
  %v221 = vrot.slane %v199, 6
  %v224 = vsub.f32 %v216, %v220
  %v225 = vsub.f32 %v217, %v221
  %v226 = vadd.f32 %v224, 1e-10
  %v227 = vadd.f32 %v225, 1e-10
  %v228 = vrcp.pop %v226
  %v229 = vrcp.pop %v227
  %v232 = vrot.slane %v228, 2
  %v233 = vrot.slane %v229, 2
  %v236 = vmul.f32 %v198, %v232
  %v237 = vmul.f32 %v199, %v233
  %v238 = vsub.f32 1.0, %v236
  %v239 = vsub.f32 1.0, %v237
  %vm240 = vcmp.lt.f32.partialorder %v238, 0.2
  %vm241 = vcmp.lt.f32.partialorder %v239, 0.2
  %v242 = vmul.f32 %v238, 0.5
  %v243 = vmul.f32 %v239, 0.5
  %v244 = vmul.f32 %v242, %v238
  %v245 = vmul.f32 %v243, %v239
  %v246 = vrcp.pop 0.2
  %v247 = vmul.f32 0.2, %v246
  %v248 = vsub.f32 1.0, %v247
  %v249 = vmul.f32 %v246, %v248
  %v250 = vadd.f32 %v246, %v249
  %vm251 = vweird.f32 %v246
  %v252 = vsel %vm251, %v246, %v250
  %v253 = vmul.f32 %v244, %v252
  %v254 = vmul.f32 %v245, %v252
  %v255 = vsub.f32 %v238, 0.1
  %v256 = vsub.f32 %v239, 0.1
  %v257 = vsel %vm240, %v253, %v255
  %v258 = vsel %vm241, %v254, %v256
  %v261 = vrot.slane %v258, 7
  %v262 = vsel %vm120, %v257, %v261
  %v264 = vsel %vm23, %v262, 0.0
  %v266 = vperm.slane %v264, 0
  %v267 = vperm.slane %v264, 1
  %v270 = vsel %vm120, %v266, 0.0
  %v271 = vsel %vm120, %v267, 0.0
  %v272 = vadd.f32 %v270, %v271
  %273 = vadd.xlane.f32.xlu0 %v272
  %v274 = vpop.xlane.xlu0 %273
  %v275 = vrot.slane %v274, 4
  %v276 = vadd.f32 %v274, %v275
  %v277 = vrot.slane %v276, 2
  %v278 = vadd.f32 %v276, %v277
  %v279 = vrot.slane %v278, 1
  %v280 = vadd.f32 %v278, %v279
  %s281 = vtos %v280
  %v282 = vsub.f32 %v128, %v132
  %v283 = vsub.f32 %v129, %v133
  %v284 = vsub.f32 %v130, %v134
  %v285 = vsub.f32 %v131, %v135
  %v286 = vand.u32 2147483647, %v282
  %v287 = vand.u32 2147483647, %v283
  %v288 = vand.u32 2147483647, %v284
  %v289 = vand.u32 2147483647, %v285
  %vm290 = vcmp.lt.f32.partialorder %v286, 1.0
  %vm291 = vcmp.lt.f32.partialorder %v287, 1.0
  %vm292 = vcmp.lt.f32.partialorder %v288, 1.0
  %vm293 = vcmp.lt.f32.partialorder %v289, 1.0
  %v294 = vmul.f32 %v286, 0.5
  %v295 = vmul.f32 %v287, 0.5
  %v296 = vmul.f32 %v288, 0.5
  %v297 = vmul.f32 %v289, 0.5
  %v298 = vmul.f32 %v294, %v286
  %v299 = vmul.f32 %v295, %v287
  %v300 = vmul.f32 %v296, %v288
  %v301 = vmul.f32 %v297, %v289
  %v302 = vsub.f32 %v286, 0.5
  %v303 = vsub.f32 %v287, 0.5
  %v304 = vsub.f32 %v288, 0.5
  %v305 = vsub.f32 %v289, 0.5
  %v306 = vsel %vm290, %v298, %v302
  %v307 = vsel %vm291, %v299, %v303
  %v308 = vsel %vm292, %v300, %v304
  %v309 = vsel %vm293, %v301, %v305
  %vm314 = vcmask 1043456
  %v315 = vrot.slane %v306, 4
  %v316 = vrot.slane %v308, 4
  %v317 = vsel %vm314, %v315, %v316
  %v318 = vrot.slane %v307, 4
  %v319 = vrot.slane %v309, 4
  %v320 = vsel %vm314, %v318, %v319
  %v325 = vsel %vm30, %v316, 0.0
  %v326 = vadd.f32 %v317, %v325
  %v327 = vrot.slane %v326, 4
  %v328 = vadd.f32 %v326, %v327
  %v329 = vrot.slane %v328, 2
  %v330 = vadd.f32 %v328, %v329
  %v331 = vrot.slane %v330, 1
  %v332 = vadd.f32 %v330, %v331
  %v333 = vsel %vm30, %v319, 0.0
  %v334 = vadd.f32 %v320, %v333
  %v335 = vrot.slane %v334, 4
  %v336 = vadd.f32 %v334, %v335
  %v337 = vrot.slane %v336, 2
  %v338 = vadd.f32 %v336, %v337
  %v339 = vrot.slane %v338, 1
  %v340 = vadd.f32 %v338, %v339
  %v343 = vrot.slane %v340, 7
  %v344 = vsel %vm120, %v332, %v343
  %v346 = vsel %vm23, %v344, 0.0
  %v348 = vperm.slane %v346, 0
  %v349 = vperm.slane %v346, 1
  %v352 = vsel %vm120, %v348, 0.0
  %v353 = vsel %vm120, %v349, 0.0
  %v354 = vadd.f32 %v352, %v353
  %355 = vadd.xlane.f32.xlu0 %v354
  %v356 = vpop.xlane.xlu0 %355
  %v357 = vrot.slane %v356, 4
  %v358 = vadd.f32 %v356, %v357
  %v359 = vrot.slane %v358, 2
  %v360 = vadd.f32 %v358, %v359
  %v361 = vrot.slane %v360, 1
  %v362 = vadd.f32 %v360, %v361
  %s363 = vtos %v362
  %v364 = vld [vmem:[%s3] ss:$4 sm:$0x3]
  %s365 = scalar_lea.vmem %s3, 1
  %v366 = vld [vmem:[%s365] ss:$4 sm:$0x3]
  %v367 = vsub.f32 %v364, %v366
  %v368 = vand.u32 2147483647, %v367
  %vm369 = vcmp.lt.f32.partialorder %v368, 1.0
  %v370 = vmul.f32 %v368, 0.5
  %v371 = vmul.f32 %v370, %v368
  %v372 = vsub.f32 %v368, 0.5
  %v373 = vsel %vm369, %v371, %v372
  %v374 = vsel %vm23, %v373, 0.0
  %v376 = vperm.slane %v374, 0
  %v377 = vperm.slane %v374, 1
  %v380 = vsel %vm120, %v376, 0.0
  %v381 = vsel %vm120, %v377, 0.0
  %v382 = vadd.f32 %v380, %v381
  %383 = vadd.xlane.f32.xlu0 %v382
  %v384 = vpop.xlane.xlu0 %383
  %v385 = vrot.slane %v384, 4
  %v386 = vadd.f32 %v384, %v385
  %v387 = vrot.slane %v386, 2
  %v388 = vadd.f32 %v386, %v387
  %v389 = vrot.slane %v388, 1
  %v390 = vadd.f32 %v388, %v389
  %s391 = vtos %v390
  %v392 = vlaneseq
  %v393 = vand.u32 %v392, 127
  %vm394 = vcmp.eq.s32.totalorder %v80, 0
  %vm395 = vcmp.eq.s32.totalorder %v393, 0
  %vm396 = vmand %vm394, %vm395
  %v397 = vstv %s281
  %v398 = vsel %vm396, %v397, 0.0
  %vm399 = vcmp.eq.s32.totalorder %v393, 1
  %vm400 = vmand %vm394, %vm399
  %v401 = vstv %s391
  %v402 = vsel %vm400, %v401, %v398
  %vm403 = vcmp.eq.s32.totalorder %v393, 2
  %vm404 = vmand %vm394, %vm403
  %v405 = vstv %s363
  %v406 = vsel %vm404, %v405, %v402
  %407 = vst [vmem:[%s5] sm:$0xff] %v406
  // Predicated region
  $region18: #{multibox_loss_forward.3} parent=0 // pred_check
    _
  $region19: #{multibox_loss_forward.3} parent=0 // pred_check_branch
    %409 = sbr.rel (0) target = $region21
  $region20: #{multibox_loss_forward.3} parent=0 // pred_region
    _
  $region21: #{multibox_loss_forward.3} parent=0 // pred_fallthru
    _
  // Predicated region
  $region22: #{multibox_loss_forward.3} parent=0 // pred_check
    _
  $region23: #{multibox_loss_forward.3} parent=0 // pred_check_branch
    %411 = sbr.rel (0) target = $region25
  $region24: #{multibox_loss_forward.3} parent=0 // pred_region
    _
  $region25: #{multibox_loss_forward.3} parent=0 // pred_fallthru
    _
  // Predicated region
  $region26: #{multibox_loss_forward.3} parent=0 // pred_check
    _
  $region27: #{multibox_loss_forward.3} parent=0 // pred_check_branch
    %413 = sbr.rel (0) target = $region29
  $region28: #{multibox_loss_forward.3} parent=0 // pred_region
    _
  $region29: #{multibox_loss_forward.3} parent=0 // pred_fallthru
    _
  // Predicated region
  $region30: #{multibox_loss_forward.3} parent=0 // pred_check
    _
  $region31: #{multibox_loss_forward.3} parent=0 // pred_check_branch
    %415 = sbr.rel (0) target = $region33
  $region32: #{multibox_loss_forward.3} parent=0 // pred_region
    _
  $region33: #{multibox_loss_forward.3} parent=0 // pred_fallthru
    _

</llo_original>
